<compile_context>
chip_gen: v7x
topology: tpu7x:2x2x1
jax: 0.10.0
libtpu: 0.0.40
codegen_flags: <defaults>
</compile_context>

<pallas_src>
import functools

import jax
import jax.numpy as jnp
from jax.experimental import pallas as pl
from jax.experimental.pallas import tpu as pltpu  # noqa: F401 (TPU backend)


def _fused_kernel(p_ref, x_ind_ref, x_org_ref, o_ref, *, f_ind, f_org):
    # p_ref layout (single packed parameter slab, shape [f_ind+f_org, c+3],
    # c = max(f_ind, f_org)):
    #   rows 0:f_ind          cols 0:f_ind  -> W1_ind  (PyTorch [out, in])
    #   rows f_ind:f_ind+f_org cols 0:f_org -> W1_org
    #   col c                               -> b1 (ind rows, then org rows)
    #   col c+1                             -> w2 (second-layer weight row)
    #   col c+2, rows 0 / 1                 -> b2_ind / b2_org
    # x_*_ref : [N, F]  natural layout (no host-side transpose)
    # o_ref   : [1, n_ind + n_org]  lane-dense merged output row
    c = max(f_ind, f_org)

    def branch(x, row0, f, b2_row):
        w1 = p_ref[row0:row0 + f, 0:f]              # [F, F]
        b1 = p_ref[row0:row0 + f, c:c + 1]          # [F, 1]
        w2 = p_ref[row0:row0 + f, c + 1:c + 2]      # [F, 1]
        b2 = p_ref[b2_row:b2_row + 1, c + 2:c + 3]  # [1, 1]
        # h_t[f, n] = sigmoid(sum_g W1[f, g] * x[n, g] + b1[f])  (MXU + VPU)
        h = jax.nn.sigmoid(
            jax.lax.dot_general(
                w1, x,
                dimension_numbers=(((1,), (1,)), ((), ())),
                preferred_element_type=jnp.float32) + b1)       # [F, N]
        # Second layer as a sublane reduce against the w2 column (no
        # degenerate [F, 1] matmul), output stays lane-dense.
        logit = jnp.sum(h * w2, axis=0, keepdims=True) + b2     # [1, N]
        return jax.nn.sigmoid(logit)

    out_ind = branch(x_ind_ref[...], 0, f_ind, 0)        # [1, n_ind]
    out_org = branch(x_org_ref[...], f_ind, f_org, 1)    # [1, n_org]
    o_ref[...] = jnp.concatenate([out_ind, out_org], axis=1).astype(o_ref.dtype)


@jax.jit
def _fused_forward(x_ind, x_org, params):
    n_ind, f_ind = x_ind.shape
    n_org, f_org = x_org.shape
    n_tot = n_ind + n_org

    def vmem_spec(shape):
        return pl.BlockSpec(shape, lambda: (0,) * len(shape))

    flops = (2 * f_ind * f_ind * n_ind + 2 * f_ind * n_ind
             + 2 * f_org * f_org * n_org + 2 * f_org * n_org)
    transcendentals = (f_ind + 1) * n_ind + (f_org + 1) * n_org
    bytes_accessed = 4 * (params.size + x_ind.size + x_org.size + n_tot)

    out = pl.pallas_call(
        functools.partial(_fused_kernel, f_ind=f_ind, f_org=f_org),
        out_shape=jax.ShapeDtypeStruct((1, n_tot), jnp.float32),
        in_specs=[
            vmem_spec(params.shape),   # packed parameter slab
            vmem_spec(x_ind.shape),    # x_ind  [N, F_ind]
            vmem_spec(x_org.shape),    # x_org  [N, F_org]
        ],
        out_specs=vmem_spec((1, n_tot)),
        cost_estimate=pl.CostEstimate(
            flops=flops,
            transcendentals=transcendentals,
            bytes_accessed=bytes_accessed),
    )(params, x_ind, x_org)

    # Lane-dense merged row -> the two prediction vectors of the module.
    return out[0, :n_ind], out[0, n_ind:]


def _init_linear(key, in_features, out_features):
    """PyTorch-style Linear init: U(-1/sqrt(fan_in), 1/sqrt(fan_in)).

    Returns (weight [out, in] -- PyTorch layout, bias [out])."""
    kw, kb = jax.random.split(key)
    bound = 1.0 / jnp.sqrt(jnp.float32(in_features))
    w = jax.random.uniform(kw, (out_features, in_features), jnp.float32,
                           minval=-bound, maxval=bound)
    b = jax.random.uniform(kb, (out_features,), jnp.float32,
                           minval=-bound, maxval=bound)
    return w, b


class Logistic02Pallas:
    def __init__(self, num_features_ind, num_features_org,
                 num_features_ext=None, num_features_txn_edge=None, *, key):
        k1, k2, k3, k4 = jax.random.split(key, 4)
        w_ind1, b_ind1 = _init_linear(k1, num_features_ind, num_features_ind)
        w_ind2, b_ind2 = _init_linear(k2, num_features_ind, 1)
        w_org1, b_org1 = _init_linear(k3, num_features_org, num_features_org)
        w_org2, b_org2 = _init_linear(k4, num_features_org, 1)

        f_ind, f_org = num_features_ind, num_features_org
        c = max(f_ind, f_org)
        # Single packed parameter slab (built once, outside the jit forward).
        slab = jnp.zeros((f_ind + f_org, c + 3), jnp.float32)
        slab = slab.at[:f_ind, :f_ind].set(w_ind1)
        slab = slab.at[f_ind:, :f_org].set(w_org1)
        slab = slab.at[:f_ind, c].set(b_ind1)
        slab = slab.at[f_ind:, c].set(b_org1)
        slab = slab.at[:f_ind, c + 1].set(w_ind2[0])
        slab = slab.at[f_ind:, c + 1].set(w_org2[0])
        slab = slab.at[0, c + 2].set(b_ind2[0])
        slab = slab.at[1, c + 2].set(b_org2[0])
        self.params = slab

        # Unpacked copies kept only for the pure-JAX reference check.
        self._raw = dict(w_ind1=w_ind1, b_ind1=b_ind1, w_ind2=w_ind2,
                         b_ind2=b_ind2, w_org1=w_org1, b_org1=b_org1,
                         w_org2=w_org2, b_org2=b_org2)

    def __call__(self, x_dict, edge_index_dict=None, edge_attr_dict=None):
        # edge_index_dict / edge_attr_dict are unused by the reference forward.
        return _fused_forward(x_dict['ind'], x_dict['org'], self.params)


def _reference(x_dict, raw):
    """Pure-JAX reference of the same math for a sanity check."""
    def branch(x, w1, b1, w2, b2):
        h = jax.nn.sigmoid(x @ w1.T + b1)
        return jax.nn.sigmoid(h @ w2.T + b2)[:, 0]
    return (branch(x_dict['ind'], raw['w_ind1'], raw['b_ind1'],
                   raw['w_ind2'], raw['b_ind2']),
            branch(x_dict['org'], raw['w_org1'], raw['b_org1'],
                   raw['w_org2'], raw['b_org2']))


if __name__ == "__main__":
    key = jax.random.PRNGKey(0)
    k_params, k_ind, k_org = jax.random.split(key, 3)

    num_features_ind = 32
    num_features_org = 16
    n_ind = 8
    n_org = 8

    model = Logistic02Pallas(num_features_ind, num_features_org, key=k_params)

    x_dict = {
        'ind': jax.random.normal(k_ind, (n_ind, num_features_ind), jnp.float32),
        'org': jax.random.normal(k_org, (n_org, num_features_org), jnp.float32),
    }

    pred_ind, pred_org = model(x_dict, {}, {})
    pred_ind = jax.block_until_ready(pred_ind)
    pred_org = jax.block_until_ready(pred_org)

    ref_ind, ref_org = _reference(x_dict, model._raw)
    assert pred_ind.shape == (n_ind,)
    assert pred_org.shape == (n_org,)
    assert jnp.allclose(pred_ind, ref_ind, atol=1e-5)
    assert jnp.allclose(pred_org, ref_org, atol=1e-5)

    print("KERNEL_OK")
</pallas_src>

<mosaic_0001>
module attributes {stable_mosaic.version = 11 : i64} {
  func.func @_fused_kernel(%arg0: memref<48x35xf32, #tpu.memory_space<vmem>>, %arg1: memref<8x32xf32, #tpu.memory_space<vmem>>, %arg2: memref<8x16xf32, #tpu.memory_space<vmem>>, %arg3: memref<1x16xf32, #tpu.memory_space<vmem>>) attributes {dimension_semantics = [], scalar_prefetch = 0 : i64, scratch_operands = 0 : i64, tpu.core_type = #tpu.core_type<tc>} {
    %c0 = arith.constant 0 : index
    %c0_0 = arith.constant 0 : index
    %0 = vector.load %arg1[%c0, %c0_0] : memref<8x32xf32, #tpu.memory_space<vmem>>, vector<8x32xf32>
    %c0_1 = arith.constant 0 : index
    %c0_2 = arith.constant 0 : index
    %1 = vector.load %arg0[%c0_1, %c0_2] : memref<48x35xf32, #tpu.memory_space<vmem>>, vector<32x32xf32>
    %c0_3 = arith.constant 0 : index
    %c32 = arith.constant 32 : index
    %2 = vector.load %arg0[%c0_3, %c32] : memref<48x35xf32, #tpu.memory_space<vmem>>, vector<32x1xf32>
    %c0_4 = arith.constant 0 : index
    %c33 = arith.constant 33 : index
    %3 = vector.load %arg0[%c0_4, %c33] : memref<48x35xf32, #tpu.memory_space<vmem>>, vector<32x1xf32>
    %c0_5 = arith.constant 0 : index
    %c34 = arith.constant 34 : index
    %4 = vector.load %arg0[%c0_5, %c34] : memref<48x35xf32, #tpu.memory_space<vmem>>, vector<1x1xf32>
    %cst = arith.constant dense<0.000000e+00> : vector<32x8xf32>
    %5 = tpu.matmul %1, %0, %cst {dimension_numbers = #tpu.dot_dimension_numbers<[1], [1], [0], [0], [0, 0, 1, 0], [], []>} : vector<32x32xf32>, vector<8x32xf32>, vector<32x8xf32> -> vector<32x8xf32>
    %6 = vector.broadcast %2 : vector<32x1xf32> to vector<32x8xf32>
    %7 = arith.addf %5, %6 : vector<32x8xf32>
    %8 = arith.negf %7 : vector<32x8xf32>
    %9 = math.exp %8 : vector<32x8xf32>
    %cst_6 = arith.constant 1.000000e+00 : f32
    %10 = vector.broadcast %cst_6 : f32 to vector<32x8xf32>
    %11 = arith.addf %10, %9 : vector<32x8xf32>
    %12 = arith.divf %10, %11 : vector<32x8xf32>
    %13 = vector.broadcast %3 : vector<32x1xf32> to vector<32x8xf32>
    %14 = arith.mulf %12, %13 : vector<32x8xf32>
    %cst_7 = arith.constant dense<0.000000e+00> : vector<8xf32>
    %15 = vector.multi_reduction <add>, %14, %cst_7 [0] : vector<32x8xf32> to vector<8xf32>
    %16 = vector.shape_cast %15 : vector<8xf32> to vector<1x8xf32>
    %17 = vector.broadcast %4 : vector<1x1xf32> to vector<1x8xf32>
    %18 = arith.addf %16, %17 : vector<1x8xf32>
    %19 = arith.negf %18 : vector<1x8xf32>
    %20 = math.exp %19 : vector<1x8xf32>
    %cst_8 = arith.constant 1.000000e+00 : f32
    %21 = vector.broadcast %cst_8 : f32 to vector<1x8xf32>
    %22 = arith.addf %21, %20 : vector<1x8xf32>
    %23 = arith.divf %21, %22 : vector<1x8xf32>
    %c0_9 = arith.constant 0 : index
    %c0_10 = arith.constant 0 : index
    %24 = vector.load %arg2[%c0_9, %c0_10] : memref<8x16xf32, #tpu.memory_space<vmem>>, vector<8x16xf32>
    %c32_11 = arith.constant 32 : index
    %c0_12 = arith.constant 0 : index
    %25 = vector.load %arg0[%c32_11, %c0_12] : memref<48x35xf32, #tpu.memory_space<vmem>>, vector<16x16xf32>
    %c32_13 = arith.constant 32 : index
    %c32_14 = arith.constant 32 : index
    %26 = vector.load %arg0[%c32_13, %c32_14] : memref<48x35xf32, #tpu.memory_space<vmem>>, vector<16x1xf32>
    %c32_15 = arith.constant 32 : index
    %c33_16 = arith.constant 33 : index
    %27 = vector.load %arg0[%c32_15, %c33_16] : memref<48x35xf32, #tpu.memory_space<vmem>>, vector<16x1xf32>
    %c1 = arith.constant 1 : index
    %c34_17 = arith.constant 34 : index
    %28 = vector.load %arg0[%c1, %c34_17] : memref<48x35xf32, #tpu.memory_space<vmem>>, vector<1x1xf32>
    %cst_18 = arith.constant dense<0.000000e+00> : vector<16x8xf32>
    %29 = tpu.matmul %25, %24, %cst_18 {dimension_numbers = #tpu.dot_dimension_numbers<[1], [1], [0], [0], [0, 0, 1, 0], [], []>} : vector<16x16xf32>, vector<8x16xf32>, vector<16x8xf32> -> vector<16x8xf32>
    %30 = vector.broadcast %26 : vector<16x1xf32> to vector<16x8xf32>
    %31 = arith.addf %29, %30 : vector<16x8xf32>
    %32 = arith.negf %31 : vector<16x8xf32>
    %33 = math.exp %32 : vector<16x8xf32>
    %cst_19 = arith.constant 1.000000e+00 : f32
    %34 = vector.broadcast %cst_19 : f32 to vector<16x8xf32>
    %35 = arith.addf %34, %33 : vector<16x8xf32>
    %36 = arith.divf %34, %35 : vector<16x8xf32>
    %37 = vector.broadcast %27 : vector<16x1xf32> to vector<16x8xf32>
    %38 = arith.mulf %36, %37 : vector<16x8xf32>
    %cst_20 = arith.constant dense<0.000000e+00> : vector<8xf32>
    %39 = vector.multi_reduction <add>, %38, %cst_20 [0] : vector<16x8xf32> to vector<8xf32>
    %40 = vector.shape_cast %39 : vector<8xf32> to vector<1x8xf32>
    %41 = vector.broadcast %28 : vector<1x1xf32> to vector<1x8xf32>
    %42 = arith.addf %40, %41 : vector<1x8xf32>
    %43 = arith.negf %42 : vector<1x8xf32>
    %44 = math.exp %43 : vector<1x8xf32>
    %cst_21 = arith.constant 1.000000e+00 : f32
    %45 = vector.broadcast %cst_21 : f32 to vector<1x8xf32>
    %46 = arith.addf %45, %44 : vector<1x8xf32>
    %47 = arith.divf %45, %46 : vector<1x8xf32>
    %48 = tpu.concatenate %23, %47 in 1 : vector<1x8xf32>, vector<1x8xf32> -> vector<1x16xf32>
    %c0_22 = arith.constant 0 : index
    %c0_23 = arith.constant 0 : index
    %49 = vector.load %arg3[%c0_22, %c0_23] : memref<1x16xf32, #tpu.memory_space<vmem>>, vector<1x16xf32>
    tpu.vector_store %arg3[%c0_22, %c0_23], %48 {strides = array<i32>} : memref<1x16xf32, #tpu.memory_space<vmem>>, vector<1x16xf32>,
    return
  }
}

</mosaic_0001>

<llo_original>
// kernel: _fused_forward.1
$region0: #{_fused_forward.1}
  #allocation0 [shape = 'u32[]', space=smem, size = 0x4, offset = 0x4, fixed_abs, tag = 'smem constant byte address 0x4 - core index']
  #allocation1 [shape = 'u32[144,128]{1,0:T(1,128)}', space=vmem, size = 0x12000, scoped, tag = 'internal scratch']
  %s0 = inlined_call_operand.vmem [shape: f32[48,35], index: 0, kind: input, shape index: {}]
  %s1 = inlined_call_operand.vmem [shape: f32[8,32], index: 1, kind: input, shape index: {}]
  %s2 = inlined_call_operand.vmem [shape: f32[8,16], index: 2, kind: input, shape index: {}]
  %s3 = inlined_call_operand.vmem [shape: f32[1,16], index: 3, kind: output, shape index: {}]
  %s4 = sld [smem:[#allocation0]]
  $region22: #{_fused_forward.1} parent=0
    _
  %s6 = ssub.s32 1, %s4
  %s7 = scalar_select 0, %s6, %s4
  // Predicated region
  $region2: #{_fused_forward.1} parent=0 // pred_check
    _
  $region3: #{_fused_forward.1} parent=0 // pred_check_branch
    %9 = sbr.rel (0) target = $region5
  $region4: #{_fused_forward.1} parent=0 // pred_region
    _
  $region5: #{_fused_forward.1} parent=0 // pred_fallthru
    _
  // Predicated region
  $region6: #{_fused_forward.1} parent=0 // pred_check
    _
  $region7: #{_fused_forward.1} parent=0 // pred_check_branch
    %11 = sbr.rel (0) target = $region9
  $region8: #{_fused_forward.1} parent=0 // pred_region
    _
  $region9: #{_fused_forward.1} parent=0 // pred_fallthru
    _
  // Predicated region
  $region10: #{_fused_forward.1} parent=0 // pred_check
    _
  $region11: #{_fused_forward.1} parent=0 // pred_check_branch
    %13 = sbr.rel (0) target = $region13
  $region12: #{_fused_forward.1} parent=0 // pred_region
    _
  $region13: #{_fused_forward.1} parent=0 // pred_fallthru
    _
  %v14 = vld [vmem:[%s1] sm:$0xff]
  %v15 = vld [vmem:[%s0] sm:$0xff]
  %v16 = vld [vmem:[%s0 + $0x8] sm:$0xff]
  %v17 = vld [vmem:[%s0 + $0x10] sm:$0xff]
  %v18 = vld [vmem:[%s0 + $0x18] sm:$0xff]
  %v19 = vld [vmem:[%s0] sm:$0x1]
  %21 = vset.pattern.permute.xlu0 32
  %22 = vperm.xlu0 %21, %v15
  %v23 = vpop.permute.xlu0 %22
  %26 = vset.pattern.permute.xlu0 32
  %27 = vperm.xlu0 %26, %v16
  %v28 = vpop.permute.xlu0 %27
  %31 = vset.pattern.permute.xlu0 32
  %32 = vperm.xlu0 %31, %v17
  %v33 = vpop.permute.xlu0 %32
  %36 = vset.pattern.permute.xlu0 32
  %37 = vperm.xlu0 %36, %v18
  %v38 = vpop.permute.xlu0 %37
  %vm40 = vcmask 261120
  %v41 = vsel %vm40, %v15, 0
  %v43 = vsel %vm40, %v16, 0
  %v45 = vsel %vm40, %v17, 0
  %v47 = vsel %vm40, %v18, 0
  %v50 = vsel %vm40, %v14, 0
  %52 = vmatprep.subr.mxu0 0.0
  %53 = vmatpush1.xpose.msra.mxu0 %v50
  %54 = vmatprep.subr.mxu0 0.0
  %55 = vmatpush1.xpose.msra.mxu0 0.0
  %56 = vmatprep.subr.mxu0 0.0
  %57 = vmatpush1.xpose.msra.mxu0 0.0
  %58 = vmatprep.subr.mxu0 0.0
  %59 = vmatpush1.xpose.msra.mxu0 0.0
  %60 = vmatprep.subr.mxu0 0.0
  %61 = vmatpush1.xpose.msra.mxu0 0.0
  %62 = vmatprep.subr.mxu0 0.0
  %63 = vmatpush1.xpose.msra.mxu0 0.0
  %64 = vmatprep.subr.mxu0 0.0
  %65 = vmatpush1.xpose.msra.mxu0 0.0
  %66 = vmatprep.subr.mxu0 0.0
  %67 = vmatpush1.xpose.msra.mxu0 0.0
  %68 = vmatprep.subr.mxu0 0.0
  %69 = vmatpush1.xpose.msra.mxu0 0.0
  %70 = vmatprep.subr.mxu0 0.0
  %71 = vmatpush1.xpose.msra.mxu0 0.0
  %72 = vmatprep.subr.mxu0 0.0
  %73 = vmatpush1.xpose.msra.mxu0 0.0
  %74 = vmatprep.subr.mxu0 0.0
  %75 = vmatpush1.xpose.msra.mxu0 0.0
  %76 = vmatprep.subr.mxu0 0.0
  %77 = vmatpush1.xpose.msra.mxu0 0.0
  %78 = vmatprep.subr.mxu0 0.0
  %79 = vmatpush1.xpose.msra.mxu0 0.0
  %80 = vmatprep.subr.mxu0 0.0
  %81 = vmatpush1.xpose.msra.mxu0 0.0
  %82 = vmatprep.subr.mxu0 0.0
  %83 = vmatpush1.xpose.msra.mxu0 0.0
  %84 = vmatprep.subr.mxu0 0.0
  %85 = vmatpush1.xpose.msra.mxu0 0.0
  %86 = vmatprep.subr.mxu0 0.0
  %87 = vmatpush1.xpose.msra.mxu0 0.0
  %88 = vmatprep.subr.mxu0 0.0
  %89 = vmatpush1.xpose.msra.mxu0 0.0
  %90 = vmatprep.subr.mxu0 0.0
  %91 = vmatpush1.xpose.msra.mxu0 0.0
  %92 = vmatprep.subr.mxu0 0.0
  %93 = vmatpush1.xpose.msra.mxu0 0.0
  %94 = vmatprep.subr.mxu0 0.0
  %95 = vmatpush1.xpose.msra.mxu0 0.0
  %96 = vmatprep.subr.mxu0 0.0
  %97 = vmatpush1.xpose.msra.mxu0 0.0
  %98 = vmatprep.subr.mxu0 0.0
  %99 = vmatpush1.xpose.msra.mxu0 0.0
  %100 = vmatprep.subr.mxu0 0.0
  %101 = vmatpush1.xpose.msra.mxu0 0.0
  %102 = vmatprep.subr.mxu0 0.0
  %103 = vmatpush1.xpose.msra.mxu0 0.0
  %104 = vmatprep.subr.mxu0 0.0
  %105 = vmatpush1.xpose.msra.mxu0 0.0
  %106 = vmatprep.subr.mxu0 0.0
  %107 = vmatpush1.xpose.msra.mxu0 0.0
  %108 = vmatprep.subr.mxu0 0.0
  %109 = vmatpush1.xpose.msra.mxu0 0.0
  %110 = vmatprep.subr.mxu0 0.0
  %111 = vmatpush1.xpose.msra.mxu0 0.0
  %112 = vmatprep.subr.mxu0 0.0
  %113 = vmatpush1.xpose.msra.mxu0 0.0
  %114 = vmatprep.subr.mxu0 0.0
  %115 = vmatpush1.xpose.msra.mxu0 0.0
  %116 = vmatprep.mubr.f32.mxu0 0.0
  %117 = vmatmul.mubr.f32.gmra.mrb[0].mxu0 %v41
  %v118 = vpop.f32.mrb[0].mxu0
  %v119 = vadd.f32 %v23, %v118
  %v120 = vpop.f32.mrb[0].mxu0
  %121 = vmatprep.mubr.f32.mxu0 0.0
  %122 = vmatmul.mubr.f32.gmra.mrb[0].mxu0 %v43
  %v123 = vpop.f32.mrb[0].mxu0
  %v124 = vadd.f32 %v28, %v123
  %v125 = vpop.f32.mrb[0].mxu0
  %126 = vmatprep.mubr.f32.mxu0 0.0
  %127 = vmatmul.mubr.f32.gmra.mrb[0].mxu0 %v45
  %v128 = vpop.f32.mrb[0].mxu0
  %v129 = vadd.f32 %v33, %v128
  %v130 = vpop.f32.mrb[0].mxu0
  %131 = vmatprep.mubr.f32.mxu0 0.0
  %132 = vmatmul.mubr.f32.gmra.mrb[0].mxu0 %v47
  %v133 = vpop.f32.mrb[0].mxu0
  %v134 = vadd.f32 %v38, %v133
  %v135 = vpop.f32.mrb[0].mxu0
  %136 = vdwg.mxu0
  %v137 = vxor.u32 %v119, 2147483648
  %v138 = vxor.u32 %v124, 2147483648
  %v139 = vxor.u32 %v129, 2147483648
  %v140 = vxor.u32 %v134, 2147483648
  %v141 = vmul.f32 %v137, 1.442695
  %v142 = vpow.pop %v141
  %v143 = vmul.f32 %v138, 1.442695
  %v144 = vpow.pop %v143
  %v145 = vmul.f32 %v139, 1.442695
  %v146 = vpow.pop %v145
  %v147 = vmul.f32 %v140, 1.442695
  %v148 = vpow.pop %v147
  %v149 = vadd.f32 %v142, 1.0
  %v150 = vadd.f32 %v144, 1.0
  %v151 = vadd.f32 %v146, 1.0
  %v152 = vadd.f32 %v148, 1.0
  %v153 = vrcp.pop %v149
  %v154 = vmul.f32 1.0, %v153
  %v155 = vrcp.pop %v150
  %v156 = vmul.f32 1.0, %v155
  %v157 = vrcp.pop %v151
  %v158 = vmul.f32 1.0, %v157
  %v159 = vrcp.pop %v152
  %v160 = vmul.f32 1.0, %v159
  %161 = vset.pattern.permute.xlu0 33
  %162 = vperm.xlu0 %161, %v15
  %v163 = vpop.permute.xlu0 %162
  %165 = vset.pattern.permute.xlu0 33
  %166 = vperm.xlu0 %165, %v16
  %v167 = vpop.permute.xlu0 %166
  %169 = vset.pattern.permute.xlu0 33
  %170 = vperm.xlu0 %169, %v17
  %v171 = vpop.permute.xlu0 %170
  %173 = vset.pattern.permute.xlu0 33
  %174 = vperm.xlu0 %173, %v18
  %v175 = vpop.permute.xlu0 %174
  %v177 = vmul.f32 %v154, %v163
  %v178 = vmul.f32 %v156, %v167
  %v179 = vmul.f32 %v158, %v171
  %v180 = vmul.f32 %v160, %v175
  %vm181 = vcmask 64512
  %v182 = vsel %vm181, %v177, 0.0
  %v183 = vsel %vm181, %v178, 0.0
  %v184 = vadd.f32 %v182, %v183
  %v185 = vsel %vm181, %v179, 0.0
  %v186 = vadd.f32 %v184, %v185
  %v187 = vsel %vm181, %v180, 0.0
  %v188 = vadd.f32 %v186, %v187
  %v189 = vrot.slane %v188, 4
  %v190 = vadd.f32 %v188, %v189
  %v191 = vrot.slane %v190, 2
  %v192 = vadd.f32 %v190, %v191
  %v193 = vrot.slane %v192, 1
  %v194 = vadd.f32 %v192, %v193
  %196 = vset.pattern.permute.xlu0 34
  %197 = vperm.xlu0 %196, %v19
  %v198 = vpop.permute.xlu0 %197
  %v200 = vadd.f32 %v194, %v198
  %v201 = vxor.u32 %v200, 2147483648
  %v202 = vmul.f32 %v201, 1.442695
  %v203 = vpow.pop %v202
  %v204 = vadd.f32 %v203, 1.0
  %v205 = vrcp.pop %v204
  %v206 = vmul.f32 1.0, %v205
  %v207 = vld [vmem:[%s2] sm:$0xff]
  %v208 = vld [vmem:[%s0 + $0x20] sm:$0xff]
  %v209 = vld [vmem:[%s0 + $0x28] sm:$0xff]
  %v210 = vld [vmem:[%s0 + $0x1] sm:$0x1]
  %212 = vset.pattern.permute.xlu0 32
  %213 = vperm.xlu0 %212, %v208
  %v214 = vpop.permute.xlu0 %213
  %217 = vset.pattern.permute.xlu0 32
  %218 = vperm.xlu0 %217, %v209
  %v219 = vpop.permute.xlu0 %218
  %vm221 = vcmask 130048
  %v222 = vsel %vm221, %v208, 0
  %v224 = vsel %vm221, %v209, 0
  %v227 = vsel %vm221, %v207, 0
  %229 = vmatprep.subr.mxu0 0.0
  %230 = vmatpush1.xpose.msra.mxu0 %v227
  %231 = vmatprep.subr.mxu0 0.0
  %232 = vmatpush1.xpose.msra.mxu0 0.0
  %233 = vmatprep.subr.mxu0 0.0
  %234 = vmatpush1.xpose.msra.mxu0 0.0
  %235 = vmatprep.subr.mxu0 0.0
  %236 = vmatpush1.xpose.msra.mxu0 0.0
  %237 = vmatprep.subr.mxu0 0.0
  %238 = vmatpush1.xpose.msra.mxu0 0.0
  %239 = vmatprep.subr.mxu0 0.0
  %240 = vmatpush1.xpose.msra.mxu0 0.0
  %241 = vmatprep.subr.mxu0 0.0
  %242 = vmatpush1.xpose.msra.mxu0 0.0
  %243 = vmatprep.subr.mxu0 0.0
  %244 = vmatpush1.xpose.msra.mxu0 0.0
  %245 = vmatprep.subr.mxu0 0.0
  %246 = vmatpush1.xpose.msra.mxu0 0.0
  %247 = vmatprep.subr.mxu0 0.0
  %248 = vmatpush1.xpose.msra.mxu0 0.0
  %249 = vmatprep.subr.mxu0 0.0
  %250 = vmatpush1.xpose.msra.mxu0 0.0
  %251 = vmatprep.subr.mxu0 0.0
  %252 = vmatpush1.xpose.msra.mxu0 0.0
  %253 = vmatprep.subr.mxu0 0.0
  %254 = vmatpush1.xpose.msra.mxu0 0.0
  %255 = vmatprep.subr.mxu0 0.0
  %256 = vmatpush1.xpose.msra.mxu0 0.0
  %257 = vmatprep.subr.mxu0 0.0
  %258 = vmatpush1.xpose.msra.mxu0 0.0
  %259 = vmatprep.subr.mxu0 0.0
  %260 = vmatpush1.xpose.msra.mxu0 0.0
  %261 = vmatprep.subr.mxu0 0.0
  %262 = vmatpush1.xpose.msra.mxu0 0.0
  %263 = vmatprep.subr.mxu0 0.0
  %264 = vmatpush1.xpose.msra.mxu0 0.0
  %265 = vmatprep.subr.mxu0 0.0
  %266 = vmatpush1.xpose.msra.mxu0 0.0
  %267 = vmatprep.subr.mxu0 0.0
  %268 = vmatpush1.xpose.msra.mxu0 0.0
  %269 = vmatprep.subr.mxu0 0.0
  %270 = vmatpush1.xpose.msra.mxu0 0.0
  %271 = vmatprep.subr.mxu0 0.0
  %272 = vmatpush1.xpose.msra.mxu0 0.0
  %273 = vmatprep.subr.mxu0 0.0
  %274 = vmatpush1.xpose.msra.mxu0 0.0
  %275 = vmatprep.subr.mxu0 0.0
  %276 = vmatpush1.xpose.msra.mxu0 0.0
  %277 = vmatprep.subr.mxu0 0.0
  %278 = vmatpush1.xpose.msra.mxu0 0.0
  %279 = vmatprep.subr.mxu0 0.0
  %280 = vmatpush1.xpose.msra.mxu0 0.0
  %281 = vmatprep.subr.mxu0 0.0
  %282 = vmatpush1.xpose.msra.mxu0 0.0
  %283 = vmatprep.subr.mxu0 0.0
  %284 = vmatpush1.xpose.msra.mxu0 0.0
  %285 = vmatprep.subr.mxu0 0.0
  %286 = vmatpush1.xpose.msra.mxu0 0.0
  %287 = vmatprep.subr.mxu0 0.0
  %288 = vmatpush1.xpose.msra.mxu0 0.0
  %289 = vmatprep.subr.mxu0 0.0
  %290 = vmatpush1.xpose.msra.mxu0 0.0
  %291 = vmatprep.subr.mxu0 0.0
  %292 = vmatpush1.xpose.msra.mxu0 0.0
  %293 = vmatprep.mubr.f32.mxu0 0.0
  %294 = vmatmul.mubr.f32.gmra.mrb[0].mxu0 %v222
  %v295 = vpop.f32.mrb[0].mxu0
  %v296 = vadd.f32 %v214, %v295
  %v297 = vpop.f32.mrb[0].mxu0
  %298 = vmatprep.mubr.f32.mxu0 0.0
  %299 = vmatmul.mubr.f32.gmra.mrb[0].mxu0 %v224
  %v300 = vpop.f32.mrb[0].mxu0
  %v301 = vadd.f32 %v219, %v300
  %v302 = vpop.f32.mrb[0].mxu0
  %303 = vdwg.mxu0
  %v304 = vxor.u32 %v296, 2147483648
  %v305 = vxor.u32 %v301, 2147483648
  %v306 = vmul.f32 %v304, 1.442695
  %v307 = vpow.pop %v306
  %v308 = vmul.f32 %v305, 1.442695
  %v309 = vpow.pop %v308
  %v310 = vadd.f32 %v307, 1.0
  %v311 = vadd.f32 %v309, 1.0
  %v312 = vrcp.pop %v310
  %v313 = vmul.f32 1.0, %v312
  %v314 = vrcp.pop %v311
  %v315 = vmul.f32 1.0, %v314
  %316 = vset.pattern.permute.xlu0 33
  %317 = vperm.xlu0 %316, %v208
  %v318 = vpop.permute.xlu0 %317
  %320 = vset.pattern.permute.xlu0 33
  %321 = vperm.xlu0 %320, %v209
  %v322 = vpop.permute.xlu0 %321
  %v324 = vmul.f32 %v313, %v318
  %v325 = vmul.f32 %v315, %v322
  %v326 = vsel %vm181, %v324, 0.0
  %v327 = vsel %vm181, %v325, 0.0
  %v328 = vadd.f32 %v326, %v327
  %v329 = vrot.slane %v328, 4
  %v330 = vadd.f32 %v328, %v329
  %v331 = vrot.slane %v330, 2
  %v332 = vadd.f32 %v330, %v331
  %v333 = vrot.slane %v332, 1
  %v334 = vadd.f32 %v332, %v333
  %336 = vset.pattern.permute.xlu0 34
  %337 = vperm.xlu0 %336, %v210
  %v338 = vpop.permute.xlu0 %337
  %v340 = vadd.f32 %v334, %v338
  %v341 = vxor.u32 %v340, 2147483648
  %v342 = vmul.f32 %v341, 1.442695
  %v343 = vpow.pop %v342
  %v344 = vadd.f32 %v343, 1.0
  %v345 = vrcp.pop %v344
  %v346 = vmul.f32 1.0, %v345
  %348 = vrot.lane.b32.xlu0 %v346, 8
  %v349 = vpop.permute.xlu0 %348
  %v351 = vsel %vm181, %v206, %v349
  %vm352 = vcmask 122880
  %353 = vst.msk [vmem:[%s3] sm:$0x1] %vm352, %v351
  // Predicated region
  $region14: #{_fused_forward.1} parent=0 // pred_check
    _
  $region15: #{_fused_forward.1} parent=0 // pred_check_branch
    %355 = sbr.rel (0) target = $region17
  $region16: #{_fused_forward.1} parent=0 // pred_region
    _
  $region17: #{_fused_forward.1} parent=0 // pred_fallthru
    _
  // Predicated region
  $region18: #{_fused_forward.1} parent=0 // pred_check
    _
  $region19: #{_fused_forward.1} parent=0 // pred_check_branch
    %357 = sbr.rel (0) target = $region21
  $region20: #{_fused_forward.1} parent=0 // pred_region
    _
  $region21: #{_fused_forward.1} parent=0 // pred_fallthru
    _

</llo_original>
